<compile_context>
chip_gen: v5e
topology: v5e:2x2
jax: 0.10.0
libtpu: 0.0.40
codegen_flags: <defaults>
</compile_context>

<pallas_src>
import jax
import jax.numpy as jnp
from jax import lax
from jax.experimental import pallas as pl
from jax.experimental.pallas import tpu as pltpu


def _make_dwt_kernel(cw, precision):
    """Build the DWT kernel for a static column-chunk width `cw` (divides W)."""
    cw2 = cw // 2

    def kernel(x_ref, c_ref, o_ref):
        # x_ref: (TB, TH, W)   c_ref: (CW, CW)   o_ref: (TB, 4, TH/2, W/2)
        tb, th, w = x_ref.shape
        th2 = th // 2
        odt = o_ref.dtype

        # Fused row (sublane) deinterleave: stride-2 on the second-minor dim,
        # unit stride on the lane dim -> the input is read from HBM once.
        # TODO(synk): for bf16 inputs verify in the bundle dump that the
        # stride-2 sublane slice does not lower to VPU unpack/select filler;
        # if it does, fold the row combine into the chunked matmul instead.
        xe = x_ref[:, pl.ds(0, th2, stride=2), :]     # even rows (TB, TH2, W)
        xo = x_ref[:, pl.ds(1, th2, stride=2), :]     # odd  rows (TB, TH2, W)

        # Row-pair sum / diff (raw scale; the 1/2 lives in the constant).
        s = (xe + xo).reshape(tb * th2, w)
        d = (xo - xe).reshape(tb * th2, w)

        c = c_ref[...]                                # (CW, CW) +/-0.5 banded block

        # Column pairing + sub-band combine on the MXU, chunked along W so the
        # MAC count is M*W*CW (not M*W*W) and every store is a 128-aligned
        # lane slice.  The chunk loop is static (W // CW iterations).
        for j in range(w // cw):
            lo = j * cw
            olo = j * cw2
            ll_hl = jnp.dot(s[:, lo:lo + cw], c,
                            preferred_element_type=jnp.float32,
                            precision=precision)      # [:, :cw2]=LL  [:, cw2:]=HL
            lh_hh = jnp.dot(d[:, lo:lo + cw], c,
                            preferred_element_type=jnp.float32,
                            precision=precision)      # [:, :cw2]=LH  [:, cw2:]=HH
            o_ref[:, 0, :, olo:olo + cw2] = ll_hl[:, :cw2].reshape(tb, th2, cw2).astype(odt)
            o_ref[:, 1, :, olo:olo + cw2] = ll_hl[:, cw2:].reshape(tb, th2, cw2).astype(odt)
            o_ref[:, 2, :, olo:olo + cw2] = lh_hh[:, :cw2].reshape(tb, th2, cw2).astype(odt)
            o_ref[:, 3, :, olo:olo + cw2] = lh_hh[:, cw2:].reshape(tb, th2, cw2).astype(odt)

    return kernel


def _pick_row_tile(h, w, itemsize, target_bytes=4 << 20):
    """Largest divisor TH of H (multiple of 16 so TH/2 % 8 == 0) whose
    (TH, W) row tile is <= ~4 MiB; whole image if it already fits."""
    if h * w * itemsize <= target_bytes:
        return h
    best = None
    for th in range(16, h, 16):
        if h % th == 0 and th * w * itemsize <= target_bytes:
            best = th
    return best if best is not None else h


def _pick_batch_tile(n, tile_bytes, n_h, target_bytes=4 << 20, min_steps=8):
    """Batch tile so input blocks are ~4 MiB and the grid keeps >= min_steps
    steps (>= 4 per TC on v7x).  Prefers an exact divisor of n near the cap;
    otherwise keeps the cap and lets the grid use cdiv (masked tail block)."""
    cap = max(1, target_bytes // max(tile_bytes, 1))
    needed_b = -(-min_steps // n_h)                      # ceil(min_steps / n_h)
    if n > needed_b:
        cap = min(cap, max(1, n // needed_b))
    tb = min(cap, n)
    for c in range(tb, max(tb // 2, 1) - 1, -1):         # nearby exact divisor
        if n % c == 0:
            return c
    return tb


def dwt(x):
    """Pallas implementation of dwt_init.  x: (D0, D1, D2, H, W)."""
    d0, d1, d2, H, W = x.shape
    assert H % 2 == 0 and W % 2 == 0, "DWT requires even spatial dims"
    H2, W2 = H // 2, W // 2
    N = d0 * d1 * d2
    dt = x.dtype
    itemsize = jnp.dtype(dt).itemsize
    xf = x.reshape(N, H, W)                      # merge leading dims (free)

    # Column-chunk width for the banded column-combine matmul.
    if W % 256 == 0:
        CW = 256
    elif W % 128 == 0:
        CW = 128
    else:
        CW = W                                   # small-image fallback (dense)
    CW2 = CW // 2

    # Constant (CW, CW) column-combine block, reused for every chunk:
    #   out[:, :CW2][k] =  0.5*(col 2k) + 0.5*(col 2k+1)   -> LL / LH
    #   out[:, CW2:][k] = -0.5*(col 2k) + 0.5*(col 2k+1)   -> HL / HH
    cols = jnp.arange(CW)
    onehot = jax.nn.one_hot(cols // 2, CW2, dtype=dt)                 # (CW, CW2)
    sign = jnp.where(cols % 2 == 0, -1.0, 1.0).astype(dt)[:, None]    # (CW, 1)
    cmat = jnp.concatenate([0.5 * onehot, (0.5 * sign) * onehot], axis=1)

    # +/-0.5 is exact in bf16 and accumulation is already f32, so DEFAULT is
    # bit-equivalent for bf16; keep HIGHEST only on the f32 path.
    precision = lax.Precision.HIGHEST if dt == jnp.float32 else lax.Precision.DEFAULT

    TH = _pick_row_tile(H, W, itemsize)
    TH2 = TH // 2
    n_h = H // TH
    TB = _pick_batch_tile(N, TH * W * itemsize, n_h)
    n_b = pl.cdiv(N, TB)

    # VMEM budget from the actual block footprint (double-buffered in/out +
    # resident constant + s/d temporaries + headroom), capped well under the
    # 64 MiB physical VMEM of a v7x TensorCore.
    in_bytes = TB * TH * W * itemsize
    out_bytes = TB * 4 * TH2 * W2 * itemsize
    const_bytes = CW * CW * itemsize
    vmem_limit = 2 * (in_bytes + out_bytes) + const_bytes + 4 * in_bytes + (4 << 20)
    vmem_limit = int(min(max(vmem_limit, 8 << 20), 40 << 20))

    out = pl.pallas_call(
        _make_dwt_kernel(CW, precision),
        out_shape=jax.ShapeDtypeStruct((N, 4, H2, W2), dt),
        grid_spec=pltpu.PrefetchScalarGridSpec(
            num_scalar_prefetch=0,
            grid=(n_b, n_h),
            in_specs=[
                pl.BlockSpec((TB, TH, W), lambda i, j: (i, j, 0)),
                pl.BlockSpec((CW, CW), lambda i, j: (0, 0)),   # resident constant
            ],
            out_specs=pl.BlockSpec((TB, 4, TH2, W2), lambda i, j: (i, 0, j, 0)),
        ),
        compiler_params=pltpu.CompilerParams(
            dimension_semantics=("parallel", "parallel"),
            vmem_limit_bytes=vmem_limit,
        ),
    )(xf, cmat)

    return out.reshape(d0, d1, d2, 4, H2, W2)


def dwt_ref(x):
    """Pure-JAX reference matching the PyTorch dwt_init exactly."""
    x01 = x[:, :, :, 0::2, :] / 2
    x02 = x[:, :, :, 1::2, :] / 2
    x1 = x01[:, :, :, :, 0::2]
    x2 = x02[:, :, :, :, 0::2]
    x3 = x01[:, :, :, :, 1::2]
    x4 = x02[:, :, :, :, 1::2]
    x_LL = x1 + x2 + x3 + x4
    x_HL = -x1 - x2 + x3 + x4
    x_LH = -x1 + x2 - x3 + x4
    x_HH = x1 - x2 - x3 + x4
    stacked = jnp.stack((x_LL, x_HL, x_LH, x_HH), axis=5)
    return jnp.transpose(stacked, (0, 1, 2, 5, 3, 4))


if __name__ == "__main__":
    key = jax.random.PRNGKey(0)
    # 5-D input implied by dwt_init's indexing: (D0, D1, D2, H, W)
    x = jax.random.normal(key, (2, 3, 4, 16, 16), dtype=jnp.float32)

    out = jax.block_until_ready(dwt(x))

    ref = dwt_ref(x)
    assert out.shape == ref.shape == (2, 3, 4, 4, 8, 8)
    assert jnp.allclose(out, ref, atol=1e-6, rtol=1e-6)

    print("KERNEL_OK")
</pallas_src>

<mosaic_0001>
module attributes {stable_mosaic.version = 11 : i64} {
  func.func @kernel(%arg0: i32, %arg1: i32, %arg2: memref<3x16x16xf32, #tpu.memory_space<vmem>>, %arg3: memref<16x16xf32, #tpu.memory_space<vmem>>, %arg4: memref<3x4x8x8xf32, #tpu.memory_space<vmem>>) attributes {dimension_semantics = [#tpu.dimension_semantics<parallel>, #tpu.dimension_semantics<parallel>], iteration_bounds = array<i64: 8, 1>, scalar_prefetch = 0 : i64, scratch_operands = 0 : i64, tpu.core_type = #tpu.core_type<tc>, window_params = [{transform_indices = @transform_0, window_bounds = array<i64: 3, 16, 16>}, {pipeline_mode = #tpu.pipeline_mode<synchronous>, transform_indices = @transform_1, window_bounds = array<i64: 16, 16>}, {transform_indices = @transform_2, window_bounds = array<i64: 3, 4, 8, 8>}]} {
    %c0 = arith.constant 0 : index
    %c0_0 = arith.constant 0 : index
    %c0_1 = arith.constant 0 : index
    %0 = tpu.strided_load %arg2[%c0, %c0_0, %c0_1] {strides = array<i32: 1, 2, 1>} : memref<3x16x16xf32, #tpu.memory_space<vmem>>, vector<3x8x16xf32>
    %c0_2 = arith.constant 0 : index
    %c1 = arith.constant 1 : index
    %c0_3 = arith.constant 0 : index
    %1 = tpu.strided_load %arg2[%c0_2, %c1, %c0_3] {strides = array<i32: 1, 2, 1>} : memref<3x16x16xf32, #tpu.memory_space<vmem>>, vector<3x8x16xf32>
    %2 = arith.addf %0, %1 : vector<3x8x16xf32>
    %3 = vector.shape_cast %2 : vector<3x8x16xf32> to vector<24x16xf32>
    %4 = arith.subf %1, %0 : vector<3x8x16xf32>
    %5 = vector.shape_cast %4 : vector<3x8x16xf32> to vector<24x16xf32>
    %c0_4 = arith.constant 0 : index
    %c0_5 = arith.constant 0 : index
    %6 = vector.load %arg3[%c0_4, %c0_5] : memref<16x16xf32, #tpu.memory_space<vmem>>, vector<16x16xf32>
    %cst = arith.constant dense<0.000000e+00> : vector<24x16xf32>
    %7 = tpu.matmul %3, %6, %cst {dimension_numbers = #tpu.dot_dimension_numbers<[1], [0], [0], [1], [0, 0, 1, 1], [], []>, precision = #tpu.contract_precision<fp32>} : vector<24x16xf32>, vector<16x16xf32>, vector<24x16xf32> -> vector<24x16xf32>
    %cst_6 = arith.constant dense<0.000000e+00> : vector<24x16xf32>
    %8 = tpu.matmul %5, %6, %cst_6 {dimension_numbers = #tpu.dot_dimension_numbers<[1], [0], [0], [1], [0, 0, 1, 1], [], []>, precision = #tpu.contract_precision<fp32>} : vector<24x16xf32>, vector<16x16xf32>, vector<24x16xf32> -> vector<24x16xf32>
    %9 = vector.extract_strided_slice %7 {offsets = [0, 0], sizes = [24, 8], strides = [1, 1]} : vector<24x16xf32> to vector<24x8xf32>
    %10 = vector.shape_cast %9 : vector<24x8xf32> to vector<3x8x8xf32>
    %c0_7 = arith.constant 0 : index
    %c0_8 = arith.constant 0 : index
    %c0_9 = arith.constant 0 : index
    %c0_10 = arith.constant 0 : index
    %11 = vector.load %arg4[%c0_7, %c0_8, %c0_9, %c0_10] : memref<3x4x8x8xf32, #tpu.memory_space<vmem>>, vector<3x1x8x8xf32>
    %12 = vector.shape_cast %11 : vector<3x1x8x8xf32> to vector<3x8x8xf32>
    %13 = vector.shape_cast %10 : vector<3x8x8xf32> to vector<3x1x8x8xf32>
    tpu.vector_store %arg4[%c0_7, %c0_8, %c0_9, %c0_10], %13 {strides = array<i32>} : memref<3x4x8x8xf32, #tpu.memory_space<vmem>>, vector<3x1x8x8xf32>,
    %14 = vector.extract_strided_slice %7 {offsets = [0, 8], sizes = [24, 8], strides = [1, 1]} : vector<24x16xf32> to vector<24x8xf32>
    %15 = vector.shape_cast %14 : vector<24x8xf32> to vector<3x8x8xf32>
    %c0_11 = arith.constant 0 : index
    %c1_12 = arith.constant 1 : index
    %c0_13 = arith.constant 0 : index
    %c0_14 = arith.constant 0 : index
    %16 = vector.load %arg4[%c0_11, %c1_12, %c0_13, %c0_14] : memref<3x4x8x8xf32, #tpu.memory_space<vmem>>, vector<3x1x8x8xf32>
    %17 = vector.shape_cast %16 : vector<3x1x8x8xf32> to vector<3x8x8xf32>
    %18 = vector.shape_cast %15 : vector<3x8x8xf32> to vector<3x1x8x8xf32>
    tpu.vector_store %arg4[%c0_11, %c1_12, %c0_13, %c0_14], %18 {strides = array<i32>} : memref<3x4x8x8xf32, #tpu.memory_space<vmem>>, vector<3x1x8x8xf32>,
    %19 = vector.extract_strided_slice %8 {offsets = [0, 0], sizes = [24, 8], strides = [1, 1]} : vector<24x16xf32> to vector<24x8xf32>
    %20 = vector.shape_cast %19 : vector<24x8xf32> to vector<3x8x8xf32>
    %c0_15 = arith.constant 0 : index
    %c2 = arith.constant 2 : index
    %c0_16 = arith.constant 0 : index
    %c0_17 = arith.constant 0 : index
    %21 = vector.load %arg4[%c0_15, %c2, %c0_16, %c0_17] : memref<3x4x8x8xf32, #tpu.memory_space<vmem>>, vector<3x1x8x8xf32>
    %22 = vector.shape_cast %21 : vector<3x1x8x8xf32> to vector<3x8x8xf32>
    %23 = vector.shape_cast %20 : vector<3x8x8xf32> to vector<3x1x8x8xf32>
    tpu.vector_store %arg4[%c0_15, %c2, %c0_16, %c0_17], %23 {strides = array<i32>} : memref<3x4x8x8xf32, #tpu.memory_space<vmem>>, vector<3x1x8x8xf32>,
    %24 = vector.extract_strided_slice %8 {offsets = [0, 8], sizes = [24, 8], strides = [1, 1]} : vector<24x16xf32> to vector<24x8xf32>
    %25 = vector.shape_cast %24 : vector<24x8xf32> to vector<3x8x8xf32>
    %c0_18 = arith.constant 0 : index
    %c3 = arith.constant 3 : index
    %c0_19 = arith.constant 0 : index
    %c0_20 = arith.constant 0 : index
    %26 = vector.load %arg4[%c0_18, %c3, %c0_19, %c0_20] : memref<3x4x8x8xf32, #tpu.memory_space<vmem>>, vector<3x1x8x8xf32>
    %27 = vector.shape_cast %26 : vector<3x1x8x8xf32> to vector<3x8x8xf32>
    %28 = vector.shape_cast %25 : vector<3x8x8xf32> to vector<3x1x8x8xf32>
    tpu.vector_store %arg4[%c0_18, %c3, %c0_19, %c0_20], %28 {strides = array<i32>} : memref<3x4x8x8xf32, #tpu.memory_space<vmem>>, vector<3x1x8x8xf32>,
    return
  }
  func.func @transform_0(%arg0: i32, %arg1: i32) -> (i32, i32, i32) {
    %c0_i32 = arith.constant 0 : i32
    %c0_i32_0 = arith.constant 0 : i32
    return %arg0, %arg1, %c0_i32 : i32, i32, i32
  }
  func.func @transform_1(%arg0: i32, %arg1: i32) -> (i32, i32) {
    %c0_i32 = arith.constant 0 : i32
    %c0_i32_0 = arith.constant 0 : i32
    %c0_i32_1 = arith.constant 0 : i32
    return %c0_i32, %c0_i32_0 : i32, i32
  }
  func.func @transform_2(%arg0: i32, %arg1: i32) -> (i32, i32, i32, i32) {
    %c0_i32 = arith.constant 0 : i32
    %c0_i32_0 = arith.constant 0 : i32
    %c0_i32_1 = arith.constant 0 : i32
    return %arg0, %c0_i32, %arg1, %c0_i32_0 : i32, i32, i32, i32
  }
}

</mosaic_0001>

<llo_original>
// kernel: tpu_custom_call.1
$region0: #{tpu_custom_call.1}
  #allocation0 [shape = 'u32[]', space=smem, size = 0x4, offset = 0x4, fixed_abs, tag = 'smem constant byte address 0x4 - core index']
  #allocation1 [shape = 'u32[72,128]{1,0:T(1,128)}', space=vmem, size = 0x9000, scoped, tag = 'internal scratch']
  %s0 = inlined_call_operand.vmem [shape: f32[24,16,16], index: 0, kind: input, shape index: {}]
  %s1 = inlined_call_operand.vmem [shape: f32[16,16], index: 1, kind: input, shape index: {}]
  %s2 = inlined_call_operand.vmem [shape: f32[24,4,8,8], index: 2, kind: output, shape index: {}]
  %s3 = sld [smem:[#allocation0]]
  $region41: #{tpu_custom_call.1} parent=0
    _
  %s5 = ssub.s32 1, %s3
  %s6 = scalar_select 0, %s5, %s3
  loop: start=0, step=1, limit=10
  $region2: #{tpu_custom_call.1} parent=0 // loop_pre_header
    _
  $region3: #{tpu_custom_call.1} parent=0 // loop_header
    %s8 = sphi 0, %s12
    %p9 = scmp.ge.s32.totalorder %s8, 10
    %s15 = sphi 0, %s27
    %s16 = sphi 0, %s23
    %s17 = sphi 0, %s15
    %s18 = sphi 0, %s16
    %s19 = sphi 0, %s17
    %s20 = sphi 0, %s18
    %s32 = sphi 0, %s34
    %s35 = sphi 0, %s32
    %s36 = sphi 0, %s35
    %s52 = sphi 0, %s36
    %s56 = sphi 0, %s56
    %s58 = sphi 0, %s56
    %s59 = sphi 0, %s58
    %s73 = sphi 0, %s59
    %s81 = sphi 0, %s83
    %s84 = sphi 0, %s81
    %s85 = sphi 0, %s84
    %s101 = sphi 0, %s85
  $region4: #{tpu_custom_call.1} parent=0 // loop_header_branch
    %11 = sbr.rel (%p9) target = $region8
  $region5: #{tpu_custom_call.1} parent=0 // loop_body
    %s13 = ssub.s32 %s8, 1
    %s14 = ssub.s32 %s8, 2
    %s21 = sadd.s32 1, %s16
    %p22 = scmp.ge.s32.totalorder %s21, 1
    %s23 = scalar_select %p22, 0, %s21
    %s24 = sadd.s32 1, %s15
    %s25 = scalar_select %p22, %s24, %s15
    %p26 = scmp.ge.s32.totalorder %s25, 8
    %s27 = scalar_select %p26, 0, %s25
    %s28 = ssub.s32 %s15, %s27
    %s29 = ssub.s32 %s16, %s23
    %s30 = sor.u32 %s28, %s29
    %p31 = scmp.eq.s32.totalorder %s30, 0
    %s33 = sadd.s32 %s32, 1
    %s34 = scalar_select %p31, %s32, %s33
    %p37 = pneg %p31
    %p38 = scmp.eq.s32.totalorder %s8, 7
    %p39 = por %p37, %p38
    %p40 = scmp.ne.s32.totalorder %s32, %s35
    %p41 = scmp.eq.s32.totalorder %s8, 0
    %p42 = por %p40, %p41
    %p43 = scmp.ne.s32.totalorder %s32, %s35
    %p44 = scmp.eq.s32.totalorder %s13, 7
    %p45 = por %p43, %p44
    %p46 = scmp.ne.s32.totalorder %s35, %s36
    %p47 = scmp.eq.s32.totalorder %s13, 0
    %p48 = por %p46, %p47
    %p49 = scmp.ne.s32.totalorder %s35, %s36
    %p50 = scmp.eq.s32.totalorder %s14, 7
    %p51 = por %p49, %p50
    %p53 = scmp.ne.s32.totalorder %s36, %s52
    %p54 = scmp.eq.s32.totalorder %s14, 0
    %p55 = por %p53, %p54
    %s57 = sadd.s32 %s56, 1
    %p60 = scmp.eq.s32.totalorder %s8, 7
    %p61 = scmp.ne.s32.totalorder %s56, %s58
    %p62 = scmp.eq.s32.totalorder %s8, 0
    %p63 = por %p61, %p62
    %p64 = scmp.ne.s32.totalorder %s56, %s58
    %p65 = scmp.eq.s32.totalorder %s13, 7
    %p66 = por %p64, %p65
    %p67 = scmp.ne.s32.totalorder %s58, %s59
    %p68 = scmp.eq.s32.totalorder %s13, 0
    %p69 = por %p67, %p68
    %p70 = scmp.ne.s32.totalorder %s58, %s59
    %p71 = scmp.eq.s32.totalorder %s14, 7
    %p72 = por %p70, %p71
    %p74 = scmp.ne.s32.totalorder %s59, %s73
    %p75 = scmp.eq.s32.totalorder %s14, 0
    %p76 = por %p74, %p75
    %s77 = ssub.s32 %s15, %s27
    %s78 = ssub.s32 %s16, %s23
    %s79 = sor.u32 %s77, %s78
    %p80 = scmp.eq.s32.totalorder %s79, 0
    %s82 = sadd.s32 %s81, 1
    %s83 = scalar_select %p80, %s81, %s82
    %p86 = pneg %p80
    %p87 = scmp.eq.s32.totalorder %s8, 7
    %p88 = por %p86, %p87
    %p89 = scmp.ne.s32.totalorder %s81, %s84
    %p90 = scmp.eq.s32.totalorder %s8, 0
    %p91 = por %p89, %p90
    %p92 = scmp.ne.s32.totalorder %s81, %s84
    %p93 = scmp.eq.s32.totalorder %s13, 7
    %p94 = por %p92, %p93
    %p95 = scmp.ne.s32.totalorder %s84, %s85
    %p96 = scmp.eq.s32.totalorder %s13, 0
    %p97 = por %p95, %p96
    %p98 = scmp.ne.s32.totalorder %s84, %s85
    %p99 = scmp.eq.s32.totalorder %s14, 7
    %p100 = por %p98, %p99
    %p102 = scmp.ne.s32.totalorder %s85, %s101
    %p103 = scmp.eq.s32.totalorder %s14, 0
    %p104 = por %p102, %p103
    %p105 = scmp.le.s32.totalorder 1, %s8
    %p106 = scmp.lt.s32.totalorder %s8, 9
    %p107 = pnand %p105, %p106
    %p108 = pneg %p107
    // Predicated region
    $region9: #{tpu_custom_call.1} parent=5 // pred_check
      _
    $region10: #{tpu_custom_call.1} parent=5 // pred_check_branch
      %110 = sbr.rel (%p107) target = $region12
    $region11: #{tpu_custom_call.1} parent=5 // pred_region
      %s111 = ssub.s32 %s8, 1
      // Predicated region
      $region13: #{tpu_custom_call.1} parent=11 // pred_check
        %p112 = pneg %p69
      $region14: #{tpu_custom_call.1} parent=11 // pred_check_branch
        %114 = sbr.rel (%p112) target = $region16
      $region15: #{tpu_custom_call.1} parent=11 // pred_region
        _
      $region16: #{tpu_custom_call.1} parent=11 // pred_fallthru
        _
    $region12: #{tpu_custom_call.1} parent=5 // pred_fallthru
      _
    %p115 = scmp.lt.s32.totalorder %s8, 8
    // Predicated region
    $region17: #{tpu_custom_call.1} parent=5 // pred_check
      %p116 = pneg %p115
    $region18: #{tpu_custom_call.1} parent=5 // pred_check_branch
      %118 = sbr.rel (%p116) target = $region20
    $region19: #{tpu_custom_call.1} parent=5 // pred_region
      // Predicated region
      $region21: #{tpu_custom_call.1} parent=19 // pred_check
        %p119 = pneg %p42
      $region22: #{tpu_custom_call.1} parent=19 // pred_check_branch
        %121 = sbr.rel (%p119) target = $region24
      $region23: #{tpu_custom_call.1} parent=19 // pred_region
        %s122 = smul.u32 3, %s15
        %s123 = smul.u32 2, %s16
        %p124 = scmp.lt.s32.totalorder %s122, 23
        %s125 = scalar_select %p124, %s122, 23
        %p126 = scmp.lt.s32.totalorder %s123, 1
        %s127 = scalar_select %p126, %s123, 1
        %s128 = smul.addr %s125, 2
        %s129 = sadd.s32 %s127, %s128
        %s130 = smul.addr %s129, 8
        %s131 = scalar_lea.vmem %s0, %s130
        %s132 = smul.u32 3, %s15
        %s133 = smul.u32 2, %s16
      $region24: #{tpu_custom_call.1} parent=19 // pred_fallthru
        _
    $region20: #{tpu_custom_call.1} parent=5 // pred_fallthru
      _
    %p134 = scmp.le.s32.totalorder 1, %s8
    %p135 = scmp.lt.s32.totalorder %s8, 9
    %p136 = pnand %p134, %p135
    %p137 = pneg %p136
    // Predicated region
    $region25: #{tpu_custom_call.1} parent=5 // pred_check
      _
    $region26: #{tpu_custom_call.1} parent=5 // pred_check_branch
      %139 = sbr.rel (%p136) target = $region28
    $region27: #{tpu_custom_call.1} parent=5 // pred_region
      %s140 = ssub.s32 %s8, 1
      %s141 = smul.u32 3, %s17
      %s142 = smul.u32 2, %s18
      %p143 = scmp.lt.s32.totalorder %s141, 23
      %s144 = scalar_select %p143, %s141, 23
      %p145 = scmp.lt.s32.totalorder %s142, 1
      %s146 = scalar_select %p145, %s142, 1
      %s147 = smul.addr %s144, 2
      %s148 = sadd.s32 %s146, %s147
      %s149 = smul.addr %s148, 8
      %s150 = scalar_lea.vmem %s0, %s149
      %p151 = pneg %p48
      %p152 = pneg %p45
      %p153 = pneg %p69
      %p154 = pneg %p66
      %p155 = pneg %p97
      %p156 = pneg %p94
      %s157 = smul.u32 3, %s17
      %p158 = scmp.lt.s32.totalorder %s157, 23
      %s159 = scalar_select %p158, %s157, 23
      %p160 = scmp.lt.s32.totalorder %s18, 0
      %s161 = scalar_select %p160, %s18, 0
      %s162 = smul.addr %s159, 4
      %s163 = sadd.s32 %s161, %s162
      %s164 = smul.addr %s163, 8
      %s165 = scalar_lea.vmem %s2, %s164
      %s166 = smul.u32 3, %s17
      %s167 = smul.u32 2, %s18
      %p168 = scmp.lt.s32.totalorder %s166, 23
      %s169 = scalar_select %p168, %s166, 23
      %p170 = scmp.lt.s32.totalorder %s167, 1
      %s171 = scalar_select %p170, %s167, 1
      %s172 = smul.addr %s169, 2
      %s173 = sadd.s32 %s171, %s172
      %s174 = smul.addr %s173, 8
      %s175 = scalar_lea.vmem %s0, %s174
      %s176 = smul.u32 3, %s17
      %s177 = smul.u32 2, %s18
      %s178 = smul.u32 3, %s17
      %p179 = scmp.lt.s32.totalorder %s178, 23
      %s180 = scalar_select %p179, %s178, 23
      %p181 = scmp.lt.s32.totalorder %s18, 0
      %s182 = scalar_select %p181, %s18, 0
      %s183 = smul.addr %s180, 4
      %s184 = sadd.s32 %s182, %s183
      %s185 = smul.addr %s184, 8
      %s186 = scalar_lea.vmem %s2, %s185
      %s187 = smul.u32 3, %s17
      %v188 = vld [vmem:[%s175] ss:$2 sm:$0xff]
      %s189 = scalar_lea.vmem %s175, 16
      %v190 = vld [vmem:[%s189] ss:$2 sm:$0xff]
      %s191 = scalar_lea.vmem %s175, 32
      %v192 = vld [vmem:[%s191] ss:$2 sm:$0xff]
      %s193 = scalar_lea.vmem %s175, 1
      %v194 = vld [vmem:[%s193] ss:$2 sm:$0xff]
      %s195 = scalar_lea.vmem %s175, 17
      %v196 = vld [vmem:[%s195] ss:$2 sm:$0xff]
      %s197 = scalar_lea.vmem %s175, 33
      %v198 = vld [vmem:[%s197] ss:$2 sm:$0xff]
      %v199 = vadd.f32 %v188, %v194
      %v200 = vadd.f32 %v190, %v196
      %v201 = vadd.f32 %v192, %v198
      %v202 = vsub.f32 %v194, %v188
      %v203 = vsub.f32 %v196, %v190
      %v204 = vsub.f32 %v198, %v192
      %v205 = vld [vmem:[%s1] sm:$0xff]
      %v206 = vld [vmem:[%s1 + $0x8] sm:$0xff]
      %vm207 = vcmask 130048
      %v209 = vsel %vm207, %v199, 0
      %v212 = vsel %vm207, %v200, 0
      %v215 = vsel %vm207, %v201, 0
      %217 = vmatpush.msra.mxu0 0.0
      %218 = vmatpush.msra.mxu0 0.0
      %219 = vmatpush.msra.mxu0 0.0
      %220 = vmatpush.msra.mxu0 0.0
      %221 = vmatpush.msra.mxu0 0.0
      %222 = vmatpush.msra.mxu0 0.0
      %223 = vmatpush.msra.mxu0 0.0
      %224 = vmatpush.msra.mxu0 0.0
      %225 = vmatpush.msra.mxu0 0.0
      %226 = vmatpush.msra.mxu0 0.0
      %227 = vmatpush.msra.mxu0 0.0
      %228 = vmatpush.msra.mxu0 0.0
      %229 = vmatpush.msra.mxu0 0.0
      %230 = vmatpush.msra.mxu0 0.0
      %v231 = vand.u32 %v206, 4294901760
      %232 = vmatpush.msra.mxu0 %v231
      %v233 = vand.u32 %v205, 4294901760
      %234 = vmatpush.msra.mxu0 %v233
      %v235 = vand.u32 %v209, 4294901760
      %v236 = vsub.f32 %v209, %v235
      %v237 = vand.u32 %v236, 4294901760
      %v238 = vsub.f32 %v236, %v237
      %v239 = vand.u32 %v238, 4294901760
      %240 = vmatmul.f32.gmra.mxu0 %v239
      %v241 = vpop.f32.mrf.mxu0
      %v242 = vadd.f32 0.0, %v241
      %v243 = vand.u32 %v212, 4294901760
      %v244 = vsub.f32 %v212, %v243
      %v245 = vand.u32 %v244, 4294901760
      %v246 = vsub.f32 %v244, %v245
      %v247 = vand.u32 %v246, 4294901760
      %248 = vmatmul.f32.gmra.mxu0 %v247
      %v249 = vpop.f32.mrf.mxu0
      %v250 = vadd.f32 0.0, %v249
      %v251 = vand.u32 %v215, 4294901760
      %v252 = vsub.f32 %v215, %v251
      %v253 = vand.u32 %v252, 4294901760
      %v254 = vsub.f32 %v252, %v253
      %v255 = vand.u32 %v254, 4294901760
      %256 = vmatmul.f32.gmra.mxu0 %v255
      %v257 = vpop.f32.mrf.mxu0
      %v258 = vadd.f32 0.0, %v257
      %259 = vdwg.mxu0
      %260 = vmatpush.msra.mxu0 0.0
      %261 = vmatpush.msra.mxu0 0.0
      %262 = vmatpush.msra.mxu0 0.0
      %263 = vmatpush.msra.mxu0 0.0
      %264 = vmatpush.msra.mxu0 0.0
      %265 = vmatpush.msra.mxu0 0.0
      %266 = vmatpush.msra.mxu0 0.0
      %267 = vmatpush.msra.mxu0 0.0
      %268 = vmatpush.msra.mxu0 0.0
      %269 = vmatpush.msra.mxu0 0.0
      %270 = vmatpush.msra.mxu0 0.0
      %271 = vmatpush.msra.mxu0 0.0
      %272 = vmatpush.msra.mxu0 0.0
      %273 = vmatpush.msra.mxu0 0.0
      %v274 = vand.u32 %v206, 4294901760
      %v275 = vsub.f32 %v206, %v274
      %v276 = vand.u32 %v275, 4294901760
      %v277 = vsub.f32 %v275, %v276
      %v278 = vand.u32 %v277, 4294901760
      %279 = vmatpush.msra.mxu0 %v278
      %v280 = vand.u32 %v205, 4294901760
      %v281 = vsub.f32 %v205, %v280
      %v282 = vand.u32 %v281, 4294901760
      %v283 = vsub.f32 %v281, %v282
      %v284 = vand.u32 %v283, 4294901760
      %285 = vmatpush.msra.mxu0 %v284
      %v286 = vand.u32 %v209, 4294901760
      %287 = vmatmul.f32.gmra.mxu0 %v286
      %v288 = vpop.f32.mrf.mxu0
      %v289 = vadd.f32 %v242, %v288
      %v290 = vand.u32 %v212, 4294901760
      %291 = vmatmul.f32.gmra.mxu0 %v290
      %v292 = vpop.f32.mrf.mxu0
      %v293 = vadd.f32 %v250, %v292
      %v294 = vand.u32 %v215, 4294901760
      %295 = vmatmul.f32.gmra.mxu0 %v294
      %v296 = vpop.f32.mrf.mxu0
      %v297 = vadd.f32 %v258, %v296
      %298 = vdwg.mxu0
      %299 = vmatpush.msra.mxu0 0.0
      %300 = vmatpush.msra.mxu0 0.0
      %301 = vmatpush.msra.mxu0 0.0
      %302 = vmatpush.msra.mxu0 0.0
      %303 = vmatpush.msra.mxu0 0.0
      %304 = vmatpush.msra.mxu0 0.0
      %305 = vmatpush.msra.mxu0 0.0
      %306 = vmatpush.msra.mxu0 0.0
      %307 = vmatpush.msra.mxu0 0.0
      %308 = vmatpush.msra.mxu0 0.0
      %309 = vmatpush.msra.mxu0 0.0
      %310 = vmatpush.msra.mxu0 0.0
      %311 = vmatpush.msra.mxu0 0.0
      %312 = vmatpush.msra.mxu0 0.0
      %v313 = vand.u32 %v206, 4294901760
      %v314 = vsub.f32 %v206, %v313
      %315 = vmatpush.msra.mxu0 %v314
      %v316 = vand.u32 %v205, 4294901760
      %v317 = vsub.f32 %v205, %v316
      %318 = vmatpush.msra.mxu0 %v317
      %v319 = vand.u32 %v209, 4294901760
      %v320 = vsub.f32 %v209, %v319
      %321 = vmatmul.f32.gmra.mxu0 %v320
      %v322 = vpop.f32.mrf.mxu0
      %v323 = vadd.f32 %v289, %v322
      %v324 = vand.u32 %v212, 4294901760
      %v325 = vsub.f32 %v212, %v324
      %326 = vmatmul.f32.gmra.mxu0 %v325
      %v327 = vpop.f32.mrf.mxu0
      %v328 = vadd.f32 %v293, %v327
      %v329 = vand.u32 %v215, 4294901760
      %v330 = vsub.f32 %v215, %v329
      %331 = vmatmul.f32.gmra.mxu0 %v330
      %v332 = vpop.f32.mrf.mxu0
      %v333 = vadd.f32 %v297, %v332
      %334 = vdwg.mxu0
      %335 = vmatpush.msra.mxu0 0.0
      %336 = vmatpush.msra.mxu0 0.0
      %337 = vmatpush.msra.mxu0 0.0
      %338 = vmatpush.msra.mxu0 0.0
      %339 = vmatpush.msra.mxu0 0.0
      %340 = vmatpush.msra.mxu0 0.0
      %341 = vmatpush.msra.mxu0 0.0
      %342 = vmatpush.msra.mxu0 0.0
      %343 = vmatpush.msra.mxu0 0.0
      %344 = vmatpush.msra.mxu0 0.0
      %345 = vmatpush.msra.mxu0 0.0
      %346 = vmatpush.msra.mxu0 0.0
      %347 = vmatpush.msra.mxu0 0.0
      %348 = vmatpush.msra.mxu0 0.0
      %v349 = vand.u32 %v206, 4294901760
      %350 = vmatpush.msra.mxu0 %v349
      %v351 = vand.u32 %v205, 4294901760
      %352 = vmatpush.msra.mxu0 %v351
      %v353 = vand.u32 %v209, 4294901760
      %v354 = vsub.f32 %v209, %v353
      %v355 = vand.u32 %v354, 4294901760
      %356 = vmatmul.f32.gmra.mxu0 %v355
      %v357 = vpop.f32.mrf.mxu0
      %v358 = vadd.f32 %v323, %v357
      %v359 = vand.u32 %v212, 4294901760
      %v360 = vsub.f32 %v212, %v359
      %v361 = vand.u32 %v360, 4294901760
      %362 = vmatmul.f32.gmra.mxu0 %v361
      %v363 = vpop.f32.mrf.mxu0
      %v364 = vadd.f32 %v328, %v363
      %v365 = vand.u32 %v215, 4294901760
      %v366 = vsub.f32 %v215, %v365
      %v367 = vand.u32 %v366, 4294901760
      %368 = vmatmul.f32.gmra.mxu0 %v367
      %v369 = vpop.f32.mrf.mxu0
      %v370 = vadd.f32 %v333, %v369
      %371 = vdwg.mxu0
      %372 = vmatpush.msra.mxu0 0.0
      %373 = vmatpush.msra.mxu0 0.0
      %374 = vmatpush.msra.mxu0 0.0
      %375 = vmatpush.msra.mxu0 0.0
      %376 = vmatpush.msra.mxu0 0.0
      %377 = vmatpush.msra.mxu0 0.0
      %378 = vmatpush.msra.mxu0 0.0
      %379 = vmatpush.msra.mxu0 0.0
      %380 = vmatpush.msra.mxu0 0.0
      %381 = vmatpush.msra.mxu0 0.0
      %382 = vmatpush.msra.mxu0 0.0
      %383 = vmatpush.msra.mxu0 0.0
      %384 = vmatpush.msra.mxu0 0.0
      %385 = vmatpush.msra.mxu0 0.0
      %v386 = vand.u32 %v206, 4294901760
      %v387 = vsub.f32 %v206, %v386
      %v388 = vand.u32 %v387, 4294901760
      %389 = vmatpush.msra.mxu0 %v388
      %v390 = vand.u32 %v205, 4294901760
      %v391 = vsub.f32 %v205, %v390
      %v392 = vand.u32 %v391, 4294901760
      %393 = vmatpush.msra.mxu0 %v392
      %v394 = vand.u32 %v209, 4294901760
      %395 = vmatmul.f32.gmra.mxu0 %v394
      %v396 = vpop.f32.mrf.mxu0
      %v397 = vadd.f32 %v358, %v396
      %v398 = vand.u32 %v212, 4294901760
      %399 = vmatmul.f32.gmra.mxu0 %v398
      %v400 = vpop.f32.mrf.mxu0
      %v401 = vadd.f32 %v364, %v400
      %v402 = vand.u32 %v215, 4294901760
      %403 = vmatmul.f32.gmra.mxu0 %v402
      %v404 = vpop.f32.mrf.mxu0
      %v405 = vadd.f32 %v370, %v404
      %406 = vdwg.mxu0
      %407 = vmatpush.msra.mxu0 0.0
      %408 = vmatpush.msra.mxu0 0.0
      %409 = vmatpush.msra.mxu0 0.0
      %410 = vmatpush.msra.mxu0 0.0
      %411 = vmatpush.msra.mxu0 0.0
      %412 = vmatpush.msra.mxu0 0.0
      %413 = vmatpush.msra.mxu0 0.0
      %414 = vmatpush.msra.mxu0 0.0
      %415 = vmatpush.msra.mxu0 0.0
      %416 = vmatpush.msra.mxu0 0.0
      %417 = vmatpush.msra.mxu0 0.0
      %418 = vmatpush.msra.mxu0 0.0
      %419 = vmatpush.msra.mxu0 0.0
      %420 = vmatpush.msra.mxu0 0.0
      %v421 = vand.u32 %v206, 4294901760
      %422 = vmatpush.msra.mxu0 %v421
      %v423 = vand.u32 %v205, 4294901760
      %424 = vmatpush.msra.mxu0 %v423
      %v425 = vand.u32 %v209, 4294901760
      %426 = vmatmul.f32.gmra.mxu0 %v425
      %v427 = vpop.f32.mrf.mxu0
      %v428 = vadd.f32 %v397, %v427
      %v429 = vand.u32 %v212, 4294901760
      %430 = vmatmul.f32.gmra.mxu0 %v429
      %v431 = vpop.f32.mrf.mxu0
      %v432 = vadd.f32 %v401, %v431
      %v433 = vand.u32 %v215, 4294901760
      %434 = vmatmul.f32.gmra.mxu0 %v433
      %v435 = vpop.f32.mrf.mxu0
      %v436 = vadd.f32 %v405, %v435
      %437 = vdwg.mxu0
      %v439 = vsel %vm207, %v202, 0
      %v442 = vsel %vm207, %v203, 0
      %v445 = vsel %vm207, %v204, 0
      %447 = vmatpush.msra.mxu0 0.0
      %448 = vmatpush.msra.mxu0 0.0
      %449 = vmatpush.msra.mxu0 0.0
      %450 = vmatpush.msra.mxu0 0.0
      %451 = vmatpush.msra.mxu0 0.0
      %452 = vmatpush.msra.mxu0 0.0
      %453 = vmatpush.msra.mxu0 0.0
      %454 = vmatpush.msra.mxu0 0.0
      %455 = vmatpush.msra.mxu0 0.0
      %456 = vmatpush.msra.mxu0 0.0
      %457 = vmatpush.msra.mxu0 0.0
      %458 = vmatpush.msra.mxu0 0.0
      %459 = vmatpush.msra.mxu0 0.0
      %460 = vmatpush.msra.mxu0 0.0
      %v461 = vand.u32 %v206, 4294901760
      %462 = vmatpush.msra.mxu0 %v461
      %v463 = vand.u32 %v205, 4294901760
      %464 = vmatpush.msra.mxu0 %v463
      %v465 = vand.u32 %v439, 4294901760
      %v466 = vsub.f32 %v439, %v465
      %v467 = vand.u32 %v466, 4294901760
      %v468 = vsub.f32 %v466, %v467
      %v469 = vand.u32 %v468, 4294901760
      %470 = vmatmul.f32.gmra.mxu0 %v469
      %v471 = vpop.f32.mrf.mxu0
      %v472 = vadd.f32 0.0, %v471
      %v473 = vand.u32 %v442, 4294901760
      %v474 = vsub.f32 %v442, %v473
      %v475 = vand.u32 %v474, 4294901760
      %v476 = vsub.f32 %v474, %v475
      %v477 = vand.u32 %v476, 4294901760
      %478 = vmatmul.f32.gmra.mxu0 %v477
      %v479 = vpop.f32.mrf.mxu0
      %v480 = vadd.f32 0.0, %v479
      %v481 = vand.u32 %v445, 4294901760
      %v482 = vsub.f32 %v445, %v481
      %v483 = vand.u32 %v482, 4294901760
      %v484 = vsub.f32 %v482, %v483
      %v485 = vand.u32 %v484, 4294901760
      %486 = vmatmul.f32.gmra.mxu0 %v485
      %v487 = vpop.f32.mrf.mxu0
      %v488 = vadd.f32 0.0, %v487
      %489 = vdwg.mxu0
      %490 = vmatpush.msra.mxu0 0.0
      %491 = vmatpush.msra.mxu0 0.0
      %492 = vmatpush.msra.mxu0 0.0
      %493 = vmatpush.msra.mxu0 0.0
      %494 = vmatpush.msra.mxu0 0.0
      %495 = vmatpush.msra.mxu0 0.0
      %496 = vmatpush.msra.mxu0 0.0
      %497 = vmatpush.msra.mxu0 0.0
      %498 = vmatpush.msra.mxu0 0.0
      %499 = vmatpush.msra.mxu0 0.0
      %500 = vmatpush.msra.mxu0 0.0
      %501 = vmatpush.msra.mxu0 0.0
      %502 = vmatpush.msra.mxu0 0.0
      %503 = vmatpush.msra.mxu0 0.0
      %v504 = vand.u32 %v206, 4294901760
      %v505 = vsub.f32 %v206, %v504
      %v506 = vand.u32 %v505, 4294901760
      %v507 = vsub.f32 %v505, %v506
      %v508 = vand.u32 %v507, 4294901760
      %509 = vmatpush.msra.mxu0 %v508
      %v510 = vand.u32 %v205, 4294901760
      %v511 = vsub.f32 %v205, %v510
      %v512 = vand.u32 %v511, 4294901760
      %v513 = vsub.f32 %v511, %v512
      %v514 = vand.u32 %v513, 4294901760
      %515 = vmatpush.msra.mxu0 %v514
      %v516 = vand.u32 %v439, 4294901760
      %517 = vmatmul.f32.gmra.mxu0 %v516
      %v518 = vpop.f32.mrf.mxu0
      %v519 = vadd.f32 %v472, %v518
      %v520 = vand.u32 %v442, 4294901760
      %521 = vmatmul.f32.gmra.mxu0 %v520
      %v522 = vpop.f32.mrf.mxu0
      %v523 = vadd.f32 %v480, %v522
      %v524 = vand.u32 %v445, 4294901760
      %525 = vmatmul.f32.gmra.mxu0 %v524
      %v526 = vpop.f32.mrf.mxu0
      %v527 = vadd.f32 %v488, %v526
      %528 = vdwg.mxu0
      %529 = vmatpush.msra.mxu0 0.0
      %530 = vmatpush.msra.mxu0 0.0
      %531 = vmatpush.msra.mxu0 0.0
      %532 = vmatpush.msra.mxu0 0.0
      %533 = vmatpush.msra.mxu0 0.0
      %534 = vmatpush.msra.mxu0 0.0
      %535 = vmatpush.msra.mxu0 0.0
      %536 = vmatpush.msra.mxu0 0.0
      %537 = vmatpush.msra.mxu0 0.0
      %538 = vmatpush.msra.mxu0 0.0
      %539 = vmatpush.msra.mxu0 0.0
      %540 = vmatpush.msra.mxu0 0.0
      %541 = vmatpush.msra.mxu0 0.0
      %542 = vmatpush.msra.mxu0 0.0
      %v543 = vand.u32 %v206, 4294901760
      %v544 = vsub.f32 %v206, %v543
      %545 = vmatpush.msra.mxu0 %v544
      %v546 = vand.u32 %v205, 4294901760
      %v547 = vsub.f32 %v205, %v546
      %548 = vmatpush.msra.mxu0 %v547
      %v549 = vand.u32 %v439, 4294901760
      %v550 = vsub.f32 %v439, %v549
      %551 = vmatmul.f32.gmra.mxu0 %v550
      %v552 = vpop.f32.mrf.mxu0
      %v553 = vadd.f32 %v519, %v552
      %v554 = vand.u32 %v442, 4294901760
      %v555 = vsub.f32 %v442, %v554
      %556 = vmatmul.f32.gmra.mxu0 %v555
      %v557 = vpop.f32.mrf.mxu0
      %v558 = vadd.f32 %v523, %v557
      %v559 = vand.u32 %v445, 4294901760
      %v560 = vsub.f32 %v445, %v559
      %561 = vmatmul.f32.gmra.mxu0 %v560
      %v562 = vpop.f32.mrf.mxu0
      %v563 = vadd.f32 %v527, %v562
      %564 = vdwg.mxu0
      %565 = vmatpush.msra.mxu0 0.0
      %566 = vmatpush.msra.mxu0 0.0
      %567 = vmatpush.msra.mxu0 0.0
      %568 = vmatpush.msra.mxu0 0.0
      %569 = vmatpush.msra.mxu0 0.0
      %570 = vmatpush.msra.mxu0 0.0
      %571 = vmatpush.msra.mxu0 0.0
      %572 = vmatpush.msra.mxu0 0.0
      %573 = vmatpush.msra.mxu0 0.0
      %574 = vmatpush.msra.mxu0 0.0
      %575 = vmatpush.msra.mxu0 0.0
      %576 = vmatpush.msra.mxu0 0.0
      %577 = vmatpush.msra.mxu0 0.0
      %578 = vmatpush.msra.mxu0 0.0
      %v579 = vand.u32 %v206, 4294901760
      %580 = vmatpush.msra.mxu0 %v579
      %v581 = vand.u32 %v205, 4294901760
      %582 = vmatpush.msra.mxu0 %v581
      %v583 = vand.u32 %v439, 4294901760
      %v584 = vsub.f32 %v439, %v583
      %v585 = vand.u32 %v584, 4294901760
      %586 = vmatmul.f32.gmra.mxu0 %v585
      %v587 = vpop.f32.mrf.mxu0
      %v588 = vadd.f32 %v553, %v587
      %v589 = vand.u32 %v442, 4294901760
      %v590 = vsub.f32 %v442, %v589
      %v591 = vand.u32 %v590, 4294901760
      %592 = vmatmul.f32.gmra.mxu0 %v591
      %v593 = vpop.f32.mrf.mxu0
      %v594 = vadd.f32 %v558, %v593
      %v595 = vand.u32 %v445, 4294901760
      %v596 = vsub.f32 %v445, %v595
      %v597 = vand.u32 %v596, 4294901760
      %598 = vmatmul.f32.gmra.mxu0 %v597
      %v599 = vpop.f32.mrf.mxu0
      %v600 = vadd.f32 %v563, %v599
      %601 = vdwg.mxu0
      %602 = vmatpush.msra.mxu0 0.0
      %603 = vmatpush.msra.mxu0 0.0
      %604 = vmatpush.msra.mxu0 0.0
      %605 = vmatpush.msra.mxu0 0.0
      %606 = vmatpush.msra.mxu0 0.0
      %607 = vmatpush.msra.mxu0 0.0
      %608 = vmatpush.msra.mxu0 0.0
      %609 = vmatpush.msra.mxu0 0.0
      %610 = vmatpush.msra.mxu0 0.0
      %611 = vmatpush.msra.mxu0 0.0
      %612 = vmatpush.msra.mxu0 0.0
      %613 = vmatpush.msra.mxu0 0.0
      %614 = vmatpush.msra.mxu0 0.0
      %615 = vmatpush.msra.mxu0 0.0
      %v616 = vand.u32 %v206, 4294901760
      %v617 = vsub.f32 %v206, %v616
      %v618 = vand.u32 %v617, 4294901760
      %619 = vmatpush.msra.mxu0 %v618
      %v620 = vand.u32 %v205, 4294901760
      %v621 = vsub.f32 %v205, %v620
      %v622 = vand.u32 %v621, 4294901760
      %623 = vmatpush.msra.mxu0 %v622
      %v624 = vand.u32 %v439, 4294901760
      %625 = vmatmul.f32.gmra.mxu0 %v624
      %v626 = vpop.f32.mrf.mxu0
      %v627 = vadd.f32 %v588, %v626
      %v628 = vand.u32 %v442, 4294901760
      %629 = vmatmul.f32.gmra.mxu0 %v628
      %v630 = vpop.f32.mrf.mxu0
      %v631 = vadd.f32 %v594, %v630
      %v632 = vand.u32 %v445, 4294901760
      %633 = vmatmul.f32.gmra.mxu0 %v632
      %v634 = vpop.f32.mrf.mxu0
      %v635 = vadd.f32 %v600, %v634
      %636 = vdwg.mxu0
      %637 = vmatpush.msra.mxu0 0.0
      %638 = vmatpush.msra.mxu0 0.0
      %639 = vmatpush.msra.mxu0 0.0
      %640 = vmatpush.msra.mxu0 0.0
      %641 = vmatpush.msra.mxu0 0.0
      %642 = vmatpush.msra.mxu0 0.0
      %643 = vmatpush.msra.mxu0 0.0
      %644 = vmatpush.msra.mxu0 0.0
      %645 = vmatpush.msra.mxu0 0.0
      %646 = vmatpush.msra.mxu0 0.0
      %647 = vmatpush.msra.mxu0 0.0
      %648 = vmatpush.msra.mxu0 0.0
      %649 = vmatpush.msra.mxu0 0.0
      %650 = vmatpush.msra.mxu0 0.0
      %v651 = vand.u32 %v206, 4294901760
      %652 = vmatpush.msra.mxu0 %v651
      %v653 = vand.u32 %v205, 4294901760
      %654 = vmatpush.msra.mxu0 %v653
      %v655 = vand.u32 %v439, 4294901760
      %656 = vmatmul.f32.gmra.mxu0 %v655
      %v657 = vpop.f32.mrf.mxu0
      %v658 = vadd.f32 %v627, %v657
      %v659 = vand.u32 %v442, 4294901760
      %660 = vmatmul.f32.gmra.mxu0 %v659
      %v661 = vpop.f32.mrf.mxu0
      %v662 = vadd.f32 %v631, %v661
      %v663 = vand.u32 %v445, 4294901760
      %664 = vmatmul.f32.gmra.mxu0 %v663
      %v665 = vpop.f32.mrf.mxu0
      %v666 = vadd.f32 %v635, %v665
      %667 = vdwg.mxu0
      %vm668 = vcmask 64512
      %669 = vst.msk [vmem:[%s186] sm:$0xff] %vm668, %v428
      %670 = vst.msk [vmem:[%s186 + $0x20] sm:$0xff] %vm668, %v432
      %671 = vst.msk [vmem:[%s186 + $0x40] sm:$0xff] %vm668, %v436
      %675 = vrot.lane.b32.xlu0 %v428, 120
      %v676 = vpop.permute.xlu0 %675
      %677 = vrot.lane.b32.xlu0 %v432, 120
      %v678 = vpop.permute.xlu0 %677
      %679 = vrot.lane.b32.xlu0 %v436, 120
      %v680 = vpop.permute.xlu0 %679
      %s684 = scalar_lea.vmem %s186, 8
      %685 = vst.msk [vmem:[%s684] sm:$0xff] %vm668, %v676
      %686 = vst.msk [vmem:[%s684 + $0x20] sm:$0xff] %vm668, %v678
      %687 = vst.msk [vmem:[%s684 + $0x40] sm:$0xff] %vm668, %v680
      %s688 = scalar_lea.vmem %s186, 16
      %689 = vst.msk [vmem:[%s688] sm:$0xff] %vm668, %v658
      %690 = vst.msk [vmem:[%s688 + $0x20] sm:$0xff] %vm668, %v662
      %691 = vst.msk [vmem:[%s688 + $0x40] sm:$0xff] %vm668, %v666
      %695 = vrot.lane.b32.xlu0 %v658, 120
      %v696 = vpop.permute.xlu0 %695
      %697 = vrot.lane.b32.xlu0 %v662, 120
      %v698 = vpop.permute.xlu0 %697
      %699 = vrot.lane.b32.xlu0 %v666, 120
      %v700 = vpop.permute.xlu0 %699
      %s704 = scalar_lea.vmem %s186, 24
      %705 = vst.msk [vmem:[%s704] sm:$0xff] %vm668, %v696
      %706 = vst.msk [vmem:[%s704 + $0x20] sm:$0xff] %vm668, %v698
      %707 = vst.msk [vmem:[%s704 + $0x40] sm:$0xff] %vm668, %v700
      %s708 = smul.u32 3, %s17
      %p709 = scmp.lt.s32.totalorder %s708, 23
      %s710 = scalar_select %p709, %s708, 23
      %p711 = scmp.lt.s32.totalorder %s18, 0
      %s712 = scalar_select %p711, %s18, 0
      %s713 = smul.addr %s710, 4
      %s714 = sadd.s32 %s712, %s713
      %s715 = smul.addr %s714, 8
      %s716 = scalar_lea.vmem %s2, %s715
      // Predicated region
      $region29: #{tpu_custom_call.1} parent=27 // pred_check
        %p717 = pneg %p94
      $region30: #{tpu_custom_call.1} parent=27 // pred_check_branch
        %719 = sbr.rel (%p717) target = $region32
      $region31: #{tpu_custom_call.1} parent=27 // pred_region
        %s720 = smul.u32 3, %s17
      $region32: #{tpu_custom_call.1} parent=27 // pred_fallthru
        _
    $region28: #{tpu_custom_call.1} parent=5 // pred_fallthru
      _
    %p721 = scmp.le.s32.totalorder 2, %s8
    // Predicated region
    $region33: #{tpu_custom_call.1} parent=5 // pred_check
      %p722 = pneg %p721
    $region34: #{tpu_custom_call.1} parent=5 // pred_check_branch
      %724 = sbr.rel (%p722) target = $region36
    $region35: #{tpu_custom_call.1} parent=5 // pred_region
      %s725 = ssub.s32 %s8, 2
      // Predicated region
      $region37: #{tpu_custom_call.1} parent=35 // pred_check
        %p726 = pneg %p100
      $region38: #{tpu_custom_call.1} parent=35 // pred_check_branch
        %728 = sbr.rel (%p726) target = $region40
      $region39: #{tpu_custom_call.1} parent=35 // pred_region
        %s729 = smul.u32 3, %s19
        %p730 = scmp.lt.s32.totalorder %s729, 23
        %s731 = scalar_select %p730, %s729, 23
        %p732 = scmp.lt.s32.totalorder %s20, 0
        %s733 = scalar_select %p732, %s20, 0
        %s734 = smul.addr %s731, 4
        %s735 = sadd.s32 %s733, %s734
        %s736 = smul.addr %s735, 8
        %s737 = scalar_lea.vmem %s2, %s736
      $region40: #{tpu_custom_call.1} parent=35 // pred_fallthru
        _
    $region36: #{tpu_custom_call.1} parent=5 // pred_fallthru
      _
  $region6: #{tpu_custom_call.1} parent=0 // loop_footer
    %s12 = sadd.s32 1, %s8
  $region7: #{tpu_custom_call.1} parent=0 // loop_footer_branch
    %7 = sbr.rel target = $region3
  $region8: #{tpu_custom_call.1} parent=0 // loop_exit
    _

</llo_original>
